<compile_context>
chip_gen: v7x
topology: tpu7x:2x2x1
jax: 0.10.0
libtpu: 0.0.40
codegen_flags: <defaults>
</compile_context>

<pallas_src>
import functools

import jax
import jax.numpy as jnp
from jax import lax
from jax.experimental import pallas as pl
from jax.experimental import pallas as pl  # noqa: F811 (kept single import path)
from jax.experimental.pallas import tpu as pltpu  # noqa: F401 (TPU backend)


# ----------------------------- Pallas kernels ------------------------------


def fused_encode_forward_kernel(
    x_ref, u_ref,                    # activations: [B, in_dim], [B, u_dim]
    wp_ref, bp_ref,                  # packed weights [L, H, H] / biases [L, 1, H]
                                     #   L = 1 (initial) + 2*num_blocks + 1 (final, padded)
    ab_ref,                          # packed [Nk + u_dim, Nk] = concat([lA.T, lB.T], 0)
    zo_ref,                          # output [2, B, Nk]: zo[0] = z = encode(x),
                                     #                    zo[1] = lA(z) + lB(u)
    *, input_dim, encode_dim, num_blocks,
):
    f32 = jnp.float32
    x = x_ref[...].astype(f32)                       # [B, in_dim]
    u = u_ref[...].astype(f32)                       # [B, u_dim]
    biases = bp_ref[...].astype(f32)                 # [L, 1, H] -- loaded once (hoisted)

    # ---- encoder: initial_fc ------------------------------------------------
    # wp_ref[0] is zero-padded to [H, H]; only the first `input_dim` rows are
    # meaningful, so slice them instead of padding x.
    h = jnp.dot(x, wp_ref[0, :input_dim, :], preferred_element_type=f32) + biases[0]

    # ---- residual blocks (unrolled at trace time) ----------------------------
    li = 1
    for _ in range(num_blocks):
        residual = h                                  # Identity residual (in == out dim)
        o = jnp.dot(h, wp_ref[li], preferred_element_type=f32) + biases[li]
        o = jnp.maximum(o, 0.0)                       # fc1 + ReLU
        o = jnp.dot(o, wp_ref[li + 1], preferred_element_type=f32) + biases[li + 1]
        o = o + residual                              # fc2 + residual
        h = jnp.maximum(o, 0.0)                       # ReLU
        li += 2

    # ---- final_fc (padded to [H, H]; only first encode_dim columns valid) ----
    enc_full = jnp.dot(h, wp_ref[li], preferred_element_type=f32) + biases[li]   # [B, H]
    enc = enc_full[:, :encode_dim]                                               # [B, E]

    # ---- in-register concats ---------------------------------------------------
    z = jnp.concatenate([x, enc], axis=-1)            # [B, Nk]      (= encode(x))
    zu = jnp.concatenate([z, u], axis=-1)             # [B, Nk + u_dim]

    # ---- out = lA(z) + lB(u) as a single dot with the packed AB matrix ---------
    out = jnp.dot(zu, ab_ref[...], preferred_element_type=f32)                   # [B, Nk]

    # ---- single stacked output (one writeback) ----------------------------------
    zo_ref[0] = z.astype(zo_ref.dtype)
    zo_ref[1] = out.astype(zo_ref.dtype)


def koopman_rollout_kernel(z0_ref, us_ref, ab_ref, zs_ref, *, Nk):
    # Multi-step Koopman rollout z_{t+1} = lA(z_t) + lB(u_t), time loop INSIDE
    # the kernel so lA/lB stay VMEM-resident and the pallas_call launch cost is
    # amortized over all timesteps.
    f32 = jnp.float32
    at = ab_ref[:Nk, :].astype(f32)                   # lA.T  [Nk, Nk]
    bt = ab_ref[Nk:, :].astype(f32)                   # lB.T  [u_dim, Nk]
    n_steps = us_ref.shape[0]                         # static

    def body(t, z):
        zn = (jnp.dot(z, at, preferred_element_type=f32)
              + jnp.dot(us_ref[t].astype(f32), bt, preferred_element_type=f32))
        zs_ref[t] = zn.astype(zs_ref.dtype)
        return zn

    lax.fori_loop(0, n_steps, body, z0_ref[...].astype(f32), unroll=True)


# ------------------------------ Wrappers ------------------------------------


def _full_spec(shape):
    # whole array as a single block (everything is tiny and fits in VMEM)
    return pl.BlockSpec(shape, lambda: tuple(0 for _ in shape))


@functools.partial(jax.jit, static_argnames=("input_dim", "encode_dim", "num_blocks"))
def encode_and_forward(x, u, packed, *, input_dim, encode_dim, num_blocks):
    """Single fused pallas_call: returns (z = encode(x), out = lA(z) + lB(u))."""
    wp, bp, ab = packed
    B = x.shape[0]
    Nk = input_dim + encode_dim
    kernel = functools.partial(
        fused_encode_forward_kernel,
        input_dim=input_dim, encode_dim=encode_dim, num_blocks=num_blocks,
    )
    operands = (x, u, wp, bp, ab)
    zo = pl.pallas_call(
        kernel,
        out_shape=jax.ShapeDtypeStruct((2, B, Nk), x.dtype),
        in_specs=[_full_spec(a.shape) for a in operands],
        out_specs=_full_spec((2, B, Nk)),
    )(*operands)
    return zo[0], zo[1]


@jax.jit
def koopman_forward(z, u, ab):
    """Module forward(z, u) = lA(z) + lB(u).

    Single-shot: kept as plain XLA -- at these shapes a Pallas launch plus the
    weight re-DMA costs more than the two tiny dots.  For repeated stepping use
    `koopman_rollout` (weights stay VMEM-resident inside one kernel).
    """
    zu = jnp.concatenate([z, u], axis=-1)
    return zu @ ab


@functools.partial(jax.jit, static_argnames=("Nk",))
def koopman_rollout(z0, us, ab, *, Nk):
    """In-kernel rollout: zs[t] = lA(zs[t-1]) + lB(us[t]), zs[-1] seeded by z0."""
    T, B, _ = us.shape
    kernel = functools.partial(koopman_rollout_kernel, Nk=Nk)
    return pl.pallas_call(
        kernel,
        out_shape=jax.ShapeDtypeStruct((T, B, Nk), z0.dtype),
        in_specs=[_full_spec(z0.shape), _full_spec(us.shape), _full_spec(ab.shape)],
        out_specs=_full_spec((T, B, Nk)),
    )(z0, us, ab)


# --------------------- Parameter packing (one-time, host side) ----------------


def pack_params(enc_params, lA_w, lB_w, *, input_dim, encode_dim, hidden_dim, num_blocks):
    """Pre-transpose all weights to [in, out] and pack into three VMEM blobs."""
    p = list(enc_params)
    w0, b0 = p[0], p[1]                               # [H, in], [1, H]
    # initial_fc transposed, zero-padded to [H, H] (rows >= input_dim are zero)
    w0t = jnp.zeros((hidden_dim, hidden_dim), jnp.float32).at[:input_dim, :].set(w0.T)
    wp, bp = [w0t], [b0]
    idx = 2
    for _ in range(num_blocks):
        wa, ba, wb, bb = p[idx], p[idx + 1], p[idx + 2], p[idx + 3]
        idx += 4
        wp += [wa.T, wb.T]
        bp += [ba, bb]
    wf, bf = p[idx], p[idx + 1]                       # [E, H], [1, E]
    # final_fc transposed, zero-padded to [H, H] / [1, H] (cols >= encode_dim are zero)
    wft = jnp.zeros((hidden_dim, hidden_dim), jnp.float32).at[:, :encode_dim].set(wf.T)
    bfp = jnp.zeros((1, hidden_dim), jnp.float32).at[:, :encode_dim].set(bf)
    wp.append(wft)
    bp.append(bfp)
    wp = jnp.stack(wp, axis=0)                        # [2 + 2*nb, H, H]
    bp = jnp.stack(bp, axis=0)                        # [2 + 2*nb, 1, H]
    # Single output-projection matrix: out = concat([z, u]) @ AB
    ab = jnp.concatenate([lA_w.T, lB_w.T], axis=0)    # [Nk + u_dim, Nk]
    return (wp, bp, ab)


# ------------------------- Parameter initialization --------------------------


def init_params(key, Nkoopman, u_dim, input_dim, encode_dim, hidden_dim, num_blocks):
    """Deterministic synthetic init matching the PyTorch module's shapes."""
    keys = iter(jax.random.split(key, 64))

    def linear_init(in_dim, out_dim):
        # PyTorch nn.Linear default: U(-1/sqrt(in_dim), 1/sqrt(in_dim))
        bound = 1.0 / jnp.sqrt(jnp.float32(in_dim))
        w = jax.random.uniform(next(keys), (out_dim, in_dim), jnp.float32, -bound, bound)
        b = jax.random.uniform(next(keys), (1, out_dim), jnp.float32, -bound, bound)
        return w, b

    enc_params = []
    enc_params.extend(linear_init(input_dim, hidden_dim))          # initial_fc
    for _ in range(num_blocks):
        enc_params.extend(linear_init(hidden_dim, hidden_dim))     # block fc1
        enc_params.extend(linear_init(hidden_dim, hidden_dim))     # block fc2
        # residual_connection is Identity (input_dim == encode_dim == hidden_dim)
    enc_params.extend(linear_init(hidden_dim, encode_dim))         # final_fc

    # lA: gaussian_init_(Nkoopman, std=1) -> Normal(0, 1/Nkoopman), then orthogonalize
    lA_w = jax.random.normal(next(keys), (Nkoopman, Nkoopman), jnp.float32) / Nkoopman
    U, _, Vh = jnp.linalg.svd(lA_w, full_matrices=False)
    lA_w = (U @ Vh) * 0.9                                          # torch.mm(U, V.t()) * 0.9

    # lB: nn.Linear(u_dim, Nkoopman, bias=False) default init
    bound = 1.0 / jnp.sqrt(jnp.float32(u_dim))
    lB_w = jax.random.uniform(next(keys), (Nkoopman, u_dim), jnp.float32, -bound, bound)

    return tuple(enc_params), lA_w, lB_w


# ------------------------------ Reference (plain JAX) ------------------------


def encode_only_ref(x, enc_params, num_blocks):
    p = list(enc_params)
    w0, b0 = p[0], p[1]
    h = x @ w0.T + b0
    idx = 2
    for _ in range(num_blocks):
        wa, ba, wb, bb = p[idx], p[idx + 1], p[idx + 2], p[idx + 3]
        idx += 4
        res = h
        o = jnp.maximum(h @ wa.T + ba, 0.0)
        o = o @ wb.T + bb + res
        h = jnp.maximum(o, 0.0)
    wf, bf = p[idx], p[idx + 1]
    return h @ wf.T + bf


def rollout_ref(z0, us, lA_w, lB_w):
    zs = []
    z = z0
    for t in range(us.shape[0]):
        z = z @ lA_w.T + us[t] @ lB_w.T
        zs.append(z)
    return jnp.stack(zs, axis=0)


# ----------------------------------- main ------------------------------------


if __name__ == "__main__":
    # Small, module-consistent shapes (Nkoopman = input_dim + encode_dim)
    Nkoopman, u_dim, input_dim, encode_dim = 24, 4, 8, 16
    hidden_dim, num_blocks = 32, 3
    batch, n_steps = 8, 6

    key = jax.random.PRNGKey(0)
    k_param, k_x, k_u, k_us = jax.random.split(key, 4)

    enc_params, lA_w, lB_w = init_params(
        k_param, Nkoopman, u_dim, input_dim, encode_dim, hidden_dim, num_blocks
    )
    packed = pack_params(
        enc_params, lA_w, lB_w,
        input_dim=input_dim, encode_dim=encode_dim,
        hidden_dim=hidden_dim, num_blocks=num_blocks,
    )

    x = jax.random.normal(k_x, (batch, input_dim), jnp.float32)
    u = jax.random.normal(k_u, (batch, u_dim), jnp.float32)
    us = jax.random.normal(k_us, (n_steps, batch, u_dim), jnp.float32)

    # Fused: z = encode(x) and out = forward(z, u) in a single pallas_call.
    z, out = encode_and_forward(
        x, u, packed, input_dim=input_dim, encode_dim=encode_dim, num_blocks=num_blocks
    )
    out = jax.block_until_ready(out)

    # Standalone single-shot forward(z, u): plain XLA (cheaper than a launch).
    out2 = jax.block_until_ready(koopman_forward(z, u, packed[2]))

    # Multi-step rollout with the time loop inside one kernel (weights VMEM-resident).
    zs = jax.block_until_ready(koopman_rollout(z, us, packed[2], Nk=Nkoopman))

    # Correctness checks against plain-JAX references
    z_ref = jnp.concatenate([x, encode_only_ref(x, enc_params, num_blocks)], axis=-1)
    out_ref = z_ref @ lA_w.T + u @ lB_w.T
    zs_ref = rollout_ref(z_ref, us, lA_w, lB_w)

    assert z.shape == (batch, Nkoopman) and out.shape == (batch, Nkoopman)
    assert zs.shape == (n_steps, batch, Nkoopman)
    assert jnp.allclose(z, z_ref, atol=1e-4, rtol=1e-4), "encode(x) mismatch vs reference"
    assert jnp.allclose(out, out_ref, atol=1e-4, rtol=1e-4), "fused forward mismatch"
    assert jnp.allclose(out2, out_ref, atol=1e-4, rtol=1e-4), "standalone forward mismatch"
    assert jnp.allclose(zs, zs_ref, atol=1e-4, rtol=1e-4), "rollout mismatch vs reference"

    print("KERNEL_OK")
</pallas_src>

<mosaic_0001>
module attributes {stable_mosaic.version = 11 : i64} {
  func.func @fused_encode_forward_kernel(%arg0: memref<8x8xf32, #tpu.memory_space<vmem>>, %arg1: memref<8x4xf32, #tpu.memory_space<vmem>>, %arg2: memref<8x32x32xf32, #tpu.memory_space<vmem>>, %arg3: memref<8x1x32xf32, #tpu.memory_space<vmem>>, %arg4: memref<28x24xf32, #tpu.memory_space<vmem>>, %arg5: memref<2x8x24xf32, #tpu.memory_space<vmem>>) attributes {dimension_semantics = [], scalar_prefetch = 0 : i64, scratch_operands = 0 : i64, tpu.core_type = #tpu.core_type<tc>} {
    %c0 = arith.constant 0 : index
    %c0_0 = arith.constant 0 : index
    %0 = vector.load %arg0[%c0, %c0_0] : memref<8x8xf32, #tpu.memory_space<vmem>>, vector<8x8xf32>
    %c0_1 = arith.constant 0 : index
    %c0_2 = arith.constant 0 : index
    %1 = vector.load %arg1[%c0_1, %c0_2] : memref<8x4xf32, #tpu.memory_space<vmem>>, vector<8x4xf32>
    %c0_3 = arith.constant 0 : index
    %c0_4 = arith.constant 0 : index
    %c0_5 = arith.constant 0 : index
    %2 = vector.load %arg3[%c0_3, %c0_4, %c0_5] : memref<8x1x32xf32, #tpu.memory_space<vmem>>, vector<8x1x32xf32>
    %c0_6 = arith.constant 0 : index
    %c0_7 = arith.constant 0 : index
    %c0_8 = arith.constant 0 : index
    %3 = vector.load %arg2[%c0_6, %c0_7, %c0_8] : memref<8x32x32xf32, #tpu.memory_space<vmem>>, vector<1x8x32xf32>
    %4 = vector.shape_cast %3 : vector<1x8x32xf32> to vector<8x32xf32>
    %cst = arith.constant dense<0.000000e+00> : vector<8x32xf32>
    %5 = tpu.matmul %0, %4, %cst {dimension_numbers = #tpu.dot_dimension_numbers<[1], [0], [0], [1], [0, 0, 1, 1], [], []>} : vector<8x8xf32>, vector<8x32xf32>, vector<8x32xf32> -> vector<8x32xf32>
    %6 = vector.extract_strided_slice %2 {offsets = [0, 0, 0], sizes = [1, 1, 32], strides = [1, 1, 1]} : vector<8x1x32xf32> to vector<1x1x32xf32>
    %7 = vector.shape_cast %6 : vector<1x1x32xf32> to vector<1x32xf32>
    %8 = vector.broadcast %7 : vector<1x32xf32> to vector<8x32xf32>
    %9 = arith.addf %5, %8 : vector<8x32xf32>
    %c1 = arith.constant 1 : index
    %c0_9 = arith.constant 0 : index
    %c0_10 = arith.constant 0 : index
    %10 = vector.load %arg2[%c1, %c0_9, %c0_10] : memref<8x32x32xf32, #tpu.memory_space<vmem>>, vector<1x32x32xf32>
    %11 = vector.shape_cast %10 : vector<1x32x32xf32> to vector<32x32xf32>
    %cst_11 = arith.constant dense<0.000000e+00> : vector<8x32xf32>
    %12 = tpu.matmul %9, %11, %cst_11 {dimension_numbers = #tpu.dot_dimension_numbers<[1], [0], [0], [1], [0, 0, 1, 1], [], []>} : vector<8x32xf32>, vector<32x32xf32>, vector<8x32xf32> -> vector<8x32xf32>
    %13 = vector.extract_strided_slice %2 {offsets = [1, 0, 0], sizes = [1, 1, 32], strides = [1, 1, 1]} : vector<8x1x32xf32> to vector<1x1x32xf32>
    %14 = vector.shape_cast %13 : vector<1x1x32xf32> to vector<1x32xf32>
    %15 = vector.broadcast %14 : vector<1x32xf32> to vector<8x32xf32>
    %16 = arith.addf %12, %15 : vector<8x32xf32>
    %cst_12 = arith.constant 0.000000e+00 : f32
    %17 = vector.broadcast %cst_12 : f32 to vector<8x32xf32>
    %18 = arith.maximumf %16, %17 : vector<8x32xf32>
    %c2 = arith.constant 2 : index
    %c0_13 = arith.constant 0 : index
    %c0_14 = arith.constant 0 : index
    %19 = vector.load %arg2[%c2, %c0_13, %c0_14] : memref<8x32x32xf32, #tpu.memory_space<vmem>>, vector<1x32x32xf32>
    %20 = vector.shape_cast %19 : vector<1x32x32xf32> to vector<32x32xf32>
    %cst_15 = arith.constant dense<0.000000e+00> : vector<8x32xf32>
    %21 = tpu.matmul %18, %20, %cst_15 {dimension_numbers = #tpu.dot_dimension_numbers<[1], [0], [0], [1], [0, 0, 1, 1], [], []>} : vector<8x32xf32>, vector<32x32xf32>, vector<8x32xf32> -> vector<8x32xf32>
    %22 = vector.extract_strided_slice %2 {offsets = [2, 0, 0], sizes = [1, 1, 32], strides = [1, 1, 1]} : vector<8x1x32xf32> to vector<1x1x32xf32>
    %23 = vector.shape_cast %22 : vector<1x1x32xf32> to vector<1x32xf32>
    %24 = vector.broadcast %23 : vector<1x32xf32> to vector<8x32xf32>
    %25 = arith.addf %21, %24 : vector<8x32xf32>
    %26 = arith.addf %25, %9 : vector<8x32xf32>
    %cst_16 = arith.constant 0.000000e+00 : f32
    %27 = vector.broadcast %cst_16 : f32 to vector<8x32xf32>
    %28 = arith.maximumf %26, %27 : vector<8x32xf32>
    %c3 = arith.constant 3 : index
    %c0_17 = arith.constant 0 : index
    %c0_18 = arith.constant 0 : index
    %29 = vector.load %arg2[%c3, %c0_17, %c0_18] : memref<8x32x32xf32, #tpu.memory_space<vmem>>, vector<1x32x32xf32>
    %30 = vector.shape_cast %29 : vector<1x32x32xf32> to vector<32x32xf32>
    %cst_19 = arith.constant dense<0.000000e+00> : vector<8x32xf32>
    %31 = tpu.matmul %28, %30, %cst_19 {dimension_numbers = #tpu.dot_dimension_numbers<[1], [0], [0], [1], [0, 0, 1, 1], [], []>} : vector<8x32xf32>, vector<32x32xf32>, vector<8x32xf32> -> vector<8x32xf32>
    %32 = vector.extract_strided_slice %2 {offsets = [3, 0, 0], sizes = [1, 1, 32], strides = [1, 1, 1]} : vector<8x1x32xf32> to vector<1x1x32xf32>
    %33 = vector.shape_cast %32 : vector<1x1x32xf32> to vector<1x32xf32>
    %34 = vector.broadcast %33 : vector<1x32xf32> to vector<8x32xf32>
    %35 = arith.addf %31, %34 : vector<8x32xf32>
    %cst_20 = arith.constant 0.000000e+00 : f32
    %36 = vector.broadcast %cst_20 : f32 to vector<8x32xf32>
    %37 = arith.maximumf %35, %36 : vector<8x32xf32>
    %c4 = arith.constant 4 : index
    %c0_21 = arith.constant 0 : index
    %c0_22 = arith.constant 0 : index
    %38 = vector.load %arg2[%c4, %c0_21, %c0_22] : memref<8x32x32xf32, #tpu.memory_space<vmem>>, vector<1x32x32xf32>
    %39 = vector.shape_cast %38 : vector<1x32x32xf32> to vector<32x32xf32>
    %cst_23 = arith.constant dense<0.000000e+00> : vector<8x32xf32>
    %40 = tpu.matmul %37, %39, %cst_23 {dimension_numbers = #tpu.dot_dimension_numbers<[1], [0], [0], [1], [0, 0, 1, 1], [], []>} : vector<8x32xf32>, vector<32x32xf32>, vector<8x32xf32> -> vector<8x32xf32>
    %41 = vector.extract_strided_slice %2 {offsets = [4, 0, 0], sizes = [1, 1, 32], strides = [1, 1, 1]} : vector<8x1x32xf32> to vector<1x1x32xf32>
    %42 = vector.shape_cast %41 : vector<1x1x32xf32> to vector<1x32xf32>
    %43 = vector.broadcast %42 : vector<1x32xf32> to vector<8x32xf32>
    %44 = arith.addf %40, %43 : vector<8x32xf32>
    %45 = arith.addf %44, %28 : vector<8x32xf32>
    %cst_24 = arith.constant 0.000000e+00 : f32
    %46 = vector.broadcast %cst_24 : f32 to vector<8x32xf32>
    %47 = arith.maximumf %45, %46 : vector<8x32xf32>
    %c5 = arith.constant 5 : index
    %c0_25 = arith.constant 0 : index
    %c0_26 = arith.constant 0 : index
    %48 = vector.load %arg2[%c5, %c0_25, %c0_26] : memref<8x32x32xf32, #tpu.memory_space<vmem>>, vector<1x32x32xf32>
    %49 = vector.shape_cast %48 : vector<1x32x32xf32> to vector<32x32xf32>
    %cst_27 = arith.constant dense<0.000000e+00> : vector<8x32xf32>
    %50 = tpu.matmul %47, %49, %cst_27 {dimension_numbers = #tpu.dot_dimension_numbers<[1], [0], [0], [1], [0, 0, 1, 1], [], []>} : vector<8x32xf32>, vector<32x32xf32>, vector<8x32xf32> -> vector<8x32xf32>
    %51 = vector.extract_strided_slice %2 {offsets = [5, 0, 0], sizes = [1, 1, 32], strides = [1, 1, 1]} : vector<8x1x32xf32> to vector<1x1x32xf32>
    %52 = vector.shape_cast %51 : vector<1x1x32xf32> to vector<1x32xf32>
    %53 = vector.broadcast %52 : vector<1x32xf32> to vector<8x32xf32>
    %54 = arith.addf %50, %53 : vector<8x32xf32>
    %cst_28 = arith.constant 0.000000e+00 : f32
    %55 = vector.broadcast %cst_28 : f32 to vector<8x32xf32>
    %56 = arith.maximumf %54, %55 : vector<8x32xf32>
    %c6 = arith.constant 6 : index
    %c0_29 = arith.constant 0 : index
    %c0_30 = arith.constant 0 : index
    %57 = vector.load %arg2[%c6, %c0_29, %c0_30] : memref<8x32x32xf32, #tpu.memory_space<vmem>>, vector<1x32x32xf32>
    %58 = vector.shape_cast %57 : vector<1x32x32xf32> to vector<32x32xf32>
    %cst_31 = arith.constant dense<0.000000e+00> : vector<8x32xf32>
    %59 = tpu.matmul %56, %58, %cst_31 {dimension_numbers = #tpu.dot_dimension_numbers<[1], [0], [0], [1], [0, 0, 1, 1], [], []>} : vector<8x32xf32>, vector<32x32xf32>, vector<8x32xf32> -> vector<8x32xf32>
    %60 = vector.extract_strided_slice %2 {offsets = [6, 0, 0], sizes = [1, 1, 32], strides = [1, 1, 1]} : vector<8x1x32xf32> to vector<1x1x32xf32>
    %61 = vector.shape_cast %60 : vector<1x1x32xf32> to vector<1x32xf32>
    %62 = vector.broadcast %61 : vector<1x32xf32> to vector<8x32xf32>
    %63 = arith.addf %59, %62 : vector<8x32xf32>
    %64 = arith.addf %63, %47 : vector<8x32xf32>
    %cst_32 = arith.constant 0.000000e+00 : f32
    %65 = vector.broadcast %cst_32 : f32 to vector<8x32xf32>
    %66 = arith.maximumf %64, %65 : vector<8x32xf32>
    %c7 = arith.constant 7 : index
    %c0_33 = arith.constant 0 : index
    %c0_34 = arith.constant 0 : index
    %67 = vector.load %arg2[%c7, %c0_33, %c0_34] : memref<8x32x32xf32, #tpu.memory_space<vmem>>, vector<1x32x32xf32>
    %68 = vector.shape_cast %67 : vector<1x32x32xf32> to vector<32x32xf32>
    %cst_35 = arith.constant dense<0.000000e+00> : vector<8x32xf32>
    %69 = tpu.matmul %66, %68, %cst_35 {dimension_numbers = #tpu.dot_dimension_numbers<[1], [0], [0], [1], [0, 0, 1, 1], [], []>} : vector<8x32xf32>, vector<32x32xf32>, vector<8x32xf32> -> vector<8x32xf32>
    %70 = vector.extract_strided_slice %2 {offsets = [7, 0, 0], sizes = [1, 1, 32], strides = [1, 1, 1]} : vector<8x1x32xf32> to vector<1x1x32xf32>
    %71 = vector.shape_cast %70 : vector<1x1x32xf32> to vector<1x32xf32>
    %72 = vector.broadcast %71 : vector<1x32xf32> to vector<8x32xf32>
    %73 = arith.addf %69, %72 : vector<8x32xf32>
    %74 = vector.extract_strided_slice %73 {offsets = [0, 0], sizes = [8, 16], strides = [1, 1]} : vector<8x32xf32> to vector<8x16xf32>
    %75 = tpu.concatenate %0, %74 in 1 : vector<8x8xf32>, vector<8x16xf32> -> vector<8x24xf32>
    %76 = tpu.concatenate %75, %1 in 1 : vector<8x24xf32>, vector<8x4xf32> -> vector<8x28xf32>
    %c0_36 = arith.constant 0 : index
    %c0_37 = arith.constant 0 : index
    %77 = vector.load %arg4[%c0_36, %c0_37] : memref<28x24xf32, #tpu.memory_space<vmem>>, vector<28x24xf32>
    %cst_38 = arith.constant dense<0.000000e+00> : vector<8x24xf32>
    %78 = tpu.matmul %76, %77, %cst_38 {dimension_numbers = #tpu.dot_dimension_numbers<[1], [0], [0], [1], [0, 0, 1, 1], [], []>} : vector<8x28xf32>, vector<28x24xf32>, vector<8x24xf32> -> vector<8x24xf32>
    %c0_39 = arith.constant 0 : index
    %c0_40 = arith.constant 0 : index
    %c0_41 = arith.constant 0 : index
    %79 = vector.load %arg5[%c0_39, %c0_40, %c0_41] : memref<2x8x24xf32, #tpu.memory_space<vmem>>, vector<1x8x24xf32>
    %80 = vector.shape_cast %79 : vector<1x8x24xf32> to vector<8x24xf32>
    %81 = vector.shape_cast %75 : vector<8x24xf32> to vector<1x8x24xf32>
    tpu.vector_store %arg5[%c0_39, %c0_40, %c0_41], %81 {strides = array<i32>} : memref<2x8x24xf32, #tpu.memory_space<vmem>>, vector<1x8x24xf32>,
    %c1_42 = arith.constant 1 : index
    %c0_43 = arith.constant 0 : index
    %c0_44 = arith.constant 0 : index
    %82 = vector.load %arg5[%c1_42, %c0_43, %c0_44] : memref<2x8x24xf32, #tpu.memory_space<vmem>>, vector<1x8x24xf32>
    %83 = vector.shape_cast %82 : vector<1x8x24xf32> to vector<8x24xf32>
    %84 = vector.shape_cast %78 : vector<8x24xf32> to vector<1x8x24xf32>
    tpu.vector_store %arg5[%c1_42, %c0_43, %c0_44], %84 {strides = array<i32>} : memref<2x8x24xf32, #tpu.memory_space<vmem>>, vector<1x8x24xf32>,
    return
  }
}

</mosaic_0001>

<llo_original>
// kernel: encode_and_forward.1
$region0: #{encode_and_forward.1}
  #allocation0 [shape = 'u32[]', space=smem, size = 0x4, offset = 0x4, fixed_abs, tag = 'smem constant byte address 0x4 - core index']
  #allocation1 [shape = 'u32[144,128]{1,0:T(1,128)}', space=vmem, size = 0x12000, scoped, tag = 'internal scratch']
  %s0 = inlined_call_operand.vmem [shape: f32[8,8], index: 0, kind: input, shape index: {}]
  %s1 = inlined_call_operand.vmem [shape: f32[8,4], index: 1, kind: input, shape index: {}]
  %s2 = inlined_call_operand.hbm [shape: f32[8,32,32], index: 2, kind: input, shape index: {}]
  %s3 = inlined_call_operand.vmem [shape: f32[8,1,32], index: 3, kind: input, shape index: {}]
  %s4 = inlined_call_operand.vmem [shape: f32[28,24], index: 4, kind: input, shape index: {}]
  %s5 = inlined_call_operand.vmem [shape: f32[2,8,24], index: 5, kind: output, shape index: {}]
  %s6 = sld [smem:[#allocation0]]
  $region34: #{encode_and_forward.1} parent=0
    _
  %s8 = ssub.s32 1, %s6
  %s9 = scalar_select 0, %s8, %s6
  $region1: #{encode_and_forward.1} parent=0
    #allocation2 [shape = 'u8[131072]{0}', space=vmem, size = 0x20000, scoped, tag = 'input window, operand 2, single buffered']
    #allocation3 [shape = 's32[1]{0}', space=sflag, size = 0x4, scoped, tag = 'scoped memory for encode_and_forward.1']
    %10 = vsyncpa [#allocation3], 0
    // Predicated region
    $region2: #{encode_and_forward.1} parent=1 // pred_check
      _
    $region3: #{encode_and_forward.1} parent=1 // pred_check_branch
      %12 = sbr.rel (0) target = $region5
    $region4: #{encode_and_forward.1} parent=1 // pred_region
      _
    $region5: #{encode_and_forward.1} parent=1 // pred_fallthru
      _
    // Predicated region
    $region6: #{encode_and_forward.1} parent=1 // pred_check
      _
    $region7: #{encode_and_forward.1} parent=1 // pred_check_branch
      %14 = sbr.rel (0) target = $region9
    $region8: #{encode_and_forward.1} parent=1 // pred_region
      _
    $region9: #{encode_and_forward.1} parent=1 // pred_fallthru
      _
    // Predicated region
    $region10: #{encode_and_forward.1} parent=1 // pred_check
      _
    $region11: #{encode_and_forward.1} parent=1 // pred_check_branch
      %16 = sbr.rel (0) target = $region13
    $region12: #{encode_and_forward.1} parent=1 // pred_region
      %s18 = ssub.s32 4096, 4096
      %19 = vsyncadd [#allocation3], %s18
      %s20 = sshll.u32 [#allocation2], 4
      %s21 = int_to_ptr.vmem [resolvable:$true] %s20
      %26 = dma.hbm_to_vmem [thread:$0]  %s2, 4096, %s21, [#allocation3], 128, 128, 8
    $region13: #{encode_and_forward.1} parent=1 // pred_fallthru
      _
    // Predicated region
    $region14: #{encode_and_forward.1} parent=1 // pred_check
      _
    $region15: #{encode_and_forward.1} parent=1 // pred_check_branch
      %28 = sbr.rel (0) target = $region17
    $region16: #{encode_and_forward.1} parent=1 // pred_region
      _
    $region17: #{encode_and_forward.1} parent=1 // pred_fallthru
      _
    // Predicated region
    $region18: #{encode_and_forward.1} parent=1 // pred_check
      _
    $region19: #{encode_and_forward.1} parent=1 // pred_check_branch
      %30 = sbr.rel (0) target = $region21
    $region20: #{encode_and_forward.1} parent=1 // pred_region
      _
    $region21: #{encode_and_forward.1} parent=1 // pred_fallthru
      _
    // Predicated region
    $region22: #{encode_and_forward.1} parent=1 // pred_check
      _
    $region23: #{encode_and_forward.1} parent=1 // pred_check_branch
      %32 = sbr.rel (0) target = $region25
    $region24: #{encode_and_forward.1} parent=1 // pred_region
      %33 = dma.done [#allocation3], 4096
    $region25: #{encode_and_forward.1} parent=1 // pred_fallthru
      _
    %v34 = vld [vmem:[%s0] sm:$0xff]
    %v35 = vld [vmem:[%s1] sm:$0xff]
    %v36 = vld [vmem:[%s3] sm:$0x1]
    %v37 = vld [vmem:[%s3 + $0x1] sm:$0x1]
    %v38 = vld [vmem:[%s3 + $0x2] sm:$0x1]
    %v39 = vld [vmem:[%s3 + $0x3] sm:$0x1]
    %v40 = vld [vmem:[%s3 + $0x4] sm:$0x1]
    %v41 = vld [vmem:[%s3 + $0x5] sm:$0x1]
    %v42 = vld [vmem:[%s3 + $0x6] sm:$0x1]
    %v43 = vld [vmem:[%s3 + $0x7] sm:$0x1]
    %v44 = vld [vmem:[#allocation2] sm:$0xff]
    %v46 = vlaneseq
    %v47 = vshrl.u32 %v46, 7
    %v48 = vsub.s32 0, %v47
    %v49 = vrot.slane %v36, %v48
    %vm51 = vcmask 64512
    %v53 = vsel %vm51, %v34, 0
    %55 = vmatprep.subr.mxu0 0.0
    %56 = vmatpush1.msra.mxu0 %v44
    %57 = vmatprep.subr.mxu0 0.0
    %58 = vmatpush1.msra.mxu0 0.0
    %59 = vmatprep.subr.mxu0 0.0
    %60 = vmatpush1.msra.mxu0 0.0
    %61 = vmatprep.subr.mxu0 0.0
    %62 = vmatpush1.msra.mxu0 0.0
    %63 = vmatprep.subr.mxu0 0.0
    %64 = vmatpush1.msra.mxu0 0.0
    %65 = vmatprep.subr.mxu0 0.0
    %66 = vmatpush1.msra.mxu0 0.0
    %67 = vmatprep.subr.mxu0 0.0
    %68 = vmatpush1.msra.mxu0 0.0
    %69 = vmatprep.subr.mxu0 0.0
    %70 = vmatpush1.msra.mxu0 0.0
    %71 = vmatprep.subr.mxu0 0.0
    %72 = vmatpush1.msra.mxu0 0.0
    %73 = vmatprep.subr.mxu0 0.0
    %74 = vmatpush1.msra.mxu0 0.0
    %75 = vmatprep.subr.mxu0 0.0
    %76 = vmatpush1.msra.mxu0 0.0
    %77 = vmatprep.subr.mxu0 0.0
    %78 = vmatpush1.msra.mxu0 0.0
    %79 = vmatprep.subr.mxu0 0.0
    %80 = vmatpush1.msra.mxu0 0.0
    %81 = vmatprep.subr.mxu0 0.0
    %82 = vmatpush1.msra.mxu0 0.0
    %83 = vmatprep.subr.mxu0 0.0
    %84 = vmatpush1.msra.mxu0 0.0
    %85 = vmatprep.subr.mxu0 0.0
    %86 = vmatpush1.msra.mxu0 0.0
    %87 = vmatprep.subr.mxu0 0.0
    %88 = vmatpush1.msra.mxu0 0.0
    %89 = vmatprep.subr.mxu0 0.0
    %90 = vmatpush1.msra.mxu0 0.0
    %91 = vmatprep.subr.mxu0 0.0
    %92 = vmatpush1.msra.mxu0 0.0
    %93 = vmatprep.subr.mxu0 0.0
    %94 = vmatpush1.msra.mxu0 0.0
    %95 = vmatprep.subr.mxu0 0.0
    %96 = vmatpush1.msra.mxu0 0.0
    %97 = vmatprep.subr.mxu0 0.0
    %98 = vmatpush1.msra.mxu0 0.0
    %99 = vmatprep.subr.mxu0 0.0
    %100 = vmatpush1.msra.mxu0 0.0
    %101 = vmatprep.subr.mxu0 0.0
    %102 = vmatpush1.msra.mxu0 0.0
    %103 = vmatprep.subr.mxu0 0.0
    %104 = vmatpush1.msra.mxu0 0.0
    %105 = vmatprep.subr.mxu0 0.0
    %106 = vmatpush1.msra.mxu0 0.0
    %107 = vmatprep.subr.mxu0 0.0
    %108 = vmatpush1.msra.mxu0 0.0
    %109 = vmatprep.subr.mxu0 0.0
    %110 = vmatpush1.msra.mxu0 0.0
    %111 = vmatprep.subr.mxu0 0.0
    %112 = vmatpush1.msra.mxu0 0.0
    %113 = vmatprep.subr.mxu0 0.0
    %114 = vmatpush1.msra.mxu0 0.0
    %115 = vmatprep.subr.mxu0 0.0
    %116 = vmatpush1.msra.mxu0 0.0
    %117 = vmatprep.subr.mxu0 0.0
    %118 = vmatpush1.msra.mxu0 0.0
    %119 = vmatprep.mubr.f32.mxu0 0.0
    %120 = vmatmul.mubr.f32.gmra.mrb[0].mxu0 %v53
    %v121 = vpop.f32.mrb[0].mxu0
    %v122 = vadd.f32 %v49, %v121
    %v123 = vpop.f32.mrb[0].mxu0
    %124 = vdwg.mxu0
    %s125 = scalar_lea.vmem [#allocation2], 32
    %v126 = vld [vmem:[%s125] sm:$0xff]
    %v127 = vld [vmem:[%s125 + $0x8] sm:$0xff]
    %v128 = vld [vmem:[%s125 + $0x10] sm:$0xff]
    %v129 = vld [vmem:[%s125 + $0x18] sm:$0xff]
    %v131 = vlaneseq
    %v132 = vshrl.u32 %v131, 7
    %v133 = vsub.s32 0, %v132
    %v134 = vrot.slane %v37, %v133
    %vm136 = vcmask 261120
    %v138 = vsel %vm136, %v122, 0
    %140 = vmatprep.subr.mxu0 0.0
    %141 = vmatpush1.msra.mxu0 %v126
    %142 = vmatprep.subr.mxu0 0.0
    %143 = vmatpush1.msra.mxu0 %v127
    %144 = vmatprep.subr.mxu0 0.0
    %145 = vmatpush1.msra.mxu0 %v128
    %146 = vmatprep.subr.mxu0 0.0
    %147 = vmatpush1.msra.mxu0 %v129
    %148 = vmatprep.subr.mxu0 0.0
    %149 = vmatpush1.msra.mxu0 0.0
    %150 = vmatprep.subr.mxu0 0.0
    %151 = vmatpush1.msra.mxu0 0.0
    %152 = vmatprep.subr.mxu0 0.0
    %153 = vmatpush1.msra.mxu0 0.0
    %154 = vmatprep.subr.mxu0 0.0
    %155 = vmatpush1.msra.mxu0 0.0
    %156 = vmatprep.subr.mxu0 0.0
    %157 = vmatpush1.msra.mxu0 0.0
    %158 = vmatprep.subr.mxu0 0.0
    %159 = vmatpush1.msra.mxu0 0.0
    %160 = vmatprep.subr.mxu0 0.0
    %161 = vmatpush1.msra.mxu0 0.0
    %162 = vmatprep.subr.mxu0 0.0
    %163 = vmatpush1.msra.mxu0 0.0
    %164 = vmatprep.subr.mxu0 0.0
    %165 = vmatpush1.msra.mxu0 0.0
    %166 = vmatprep.subr.mxu0 0.0
    %167 = vmatpush1.msra.mxu0 0.0
    %168 = vmatprep.subr.mxu0 0.0
    %169 = vmatpush1.msra.mxu0 0.0
    %170 = vmatprep.subr.mxu0 0.0
    %171 = vmatpush1.msra.mxu0 0.0
    %172 = vmatprep.subr.mxu0 0.0
    %173 = vmatpush1.msra.mxu0 0.0
    %174 = vmatprep.subr.mxu0 0.0
    %175 = vmatpush1.msra.mxu0 0.0
    %176 = vmatprep.subr.mxu0 0.0
    %177 = vmatpush1.msra.mxu0 0.0
    %178 = vmatprep.subr.mxu0 0.0
    %179 = vmatpush1.msra.mxu0 0.0
    %180 = vmatprep.subr.mxu0 0.0
    %181 = vmatpush1.msra.mxu0 0.0
    %182 = vmatprep.subr.mxu0 0.0
    %183 = vmatpush1.msra.mxu0 0.0
    %184 = vmatprep.subr.mxu0 0.0
    %185 = vmatpush1.msra.mxu0 0.0
    %186 = vmatprep.subr.mxu0 0.0
    %187 = vmatpush1.msra.mxu0 0.0
    %188 = vmatprep.subr.mxu0 0.0
    %189 = vmatpush1.msra.mxu0 0.0
    %190 = vmatprep.subr.mxu0 0.0
    %191 = vmatpush1.msra.mxu0 0.0
    %192 = vmatprep.subr.mxu0 0.0
    %193 = vmatpush1.msra.mxu0 0.0
    %194 = vmatprep.subr.mxu0 0.0
    %195 = vmatpush1.msra.mxu0 0.0
    %196 = vmatprep.subr.mxu0 0.0
    %197 = vmatpush1.msra.mxu0 0.0
    %198 = vmatprep.subr.mxu0 0.0
    %199 = vmatpush1.msra.mxu0 0.0
    %200 = vmatprep.subr.mxu0 0.0
    %201 = vmatpush1.msra.mxu0 0.0
    %202 = vmatprep.subr.mxu0 0.0
    %203 = vmatpush1.msra.mxu0 0.0
    %204 = vmatprep.mubr.f32.mxu0 0.0
    %205 = vmatmul.mubr.f32.gmra.mrb[0].mxu0 %v138
    %v206 = vpop.f32.mrb[0].mxu0
    %v207 = vadd.f32 %v134, %v206
    %v208 = vpop.f32.mrb[0].mxu0
    %209 = vdwg.mxu0
    %v210 = vmax.f32 %v207, 0.0
    %s211 = scalar_lea.vmem [#allocation2], 64
    %v212 = vld [vmem:[%s211] sm:$0xff]
    %v213 = vld [vmem:[%s211 + $0x8] sm:$0xff]
    %v214 = vld [vmem:[%s211 + $0x10] sm:$0xff]
    %v215 = vld [vmem:[%s211 + $0x18] sm:$0xff]
    %v217 = vlaneseq
    %v218 = vshrl.u32 %v217, 7
    %v219 = vsub.s32 0, %v218
    %v220 = vrot.slane %v38, %v219
    %v223 = vsel %vm136, %v210, 0
    %225 = vmatprep.subr.mxu0 0.0
    %226 = vmatpush1.msra.mxu0 %v212
    %227 = vmatprep.subr.mxu0 0.0
    %228 = vmatpush1.msra.mxu0 %v213
    %229 = vmatprep.subr.mxu0 0.0
    %230 = vmatpush1.msra.mxu0 %v214
    %231 = vmatprep.subr.mxu0 0.0
    %232 = vmatpush1.msra.mxu0 %v215
    %233 = vmatprep.subr.mxu0 0.0
    %234 = vmatpush1.msra.mxu0 0.0
    %235 = vmatprep.subr.mxu0 0.0
    %236 = vmatpush1.msra.mxu0 0.0
    %237 = vmatprep.subr.mxu0 0.0
    %238 = vmatpush1.msra.mxu0 0.0
    %239 = vmatprep.subr.mxu0 0.0
    %240 = vmatpush1.msra.mxu0 0.0
    %241 = vmatprep.subr.mxu0 0.0
    %242 = vmatpush1.msra.mxu0 0.0
    %243 = vmatprep.subr.mxu0 0.0
    %244 = vmatpush1.msra.mxu0 0.0
    %245 = vmatprep.subr.mxu0 0.0
    %246 = vmatpush1.msra.mxu0 0.0
    %247 = vmatprep.subr.mxu0 0.0
    %248 = vmatpush1.msra.mxu0 0.0
    %249 = vmatprep.subr.mxu0 0.0
    %250 = vmatpush1.msra.mxu0 0.0
    %251 = vmatprep.subr.mxu0 0.0
    %252 = vmatpush1.msra.mxu0 0.0
    %253 = vmatprep.subr.mxu0 0.0
    %254 = vmatpush1.msra.mxu0 0.0
    %255 = vmatprep.subr.mxu0 0.0
    %256 = vmatpush1.msra.mxu0 0.0
    %257 = vmatprep.subr.mxu0 0.0
    %258 = vmatpush1.msra.mxu0 0.0
    %259 = vmatprep.subr.mxu0 0.0
    %260 = vmatpush1.msra.mxu0 0.0
    %261 = vmatprep.subr.mxu0 0.0
    %262 = vmatpush1.msra.mxu0 0.0
    %263 = vmatprep.subr.mxu0 0.0
    %264 = vmatpush1.msra.mxu0 0.0
    %265 = vmatprep.subr.mxu0 0.0
    %266 = vmatpush1.msra.mxu0 0.0
    %267 = vmatprep.subr.mxu0 0.0
    %268 = vmatpush1.msra.mxu0 0.0
    %269 = vmatprep.subr.mxu0 0.0
    %270 = vmatpush1.msra.mxu0 0.0
    %271 = vmatprep.subr.mxu0 0.0
    %272 = vmatpush1.msra.mxu0 0.0
    %273 = vmatprep.subr.mxu0 0.0
    %274 = vmatpush1.msra.mxu0 0.0
    %275 = vmatprep.subr.mxu0 0.0
    %276 = vmatpush1.msra.mxu0 0.0
    %277 = vmatprep.subr.mxu0 0.0
    %278 = vmatpush1.msra.mxu0 0.0
    %279 = vmatprep.subr.mxu0 0.0
    %280 = vmatpush1.msra.mxu0 0.0
    %281 = vmatprep.subr.mxu0 0.0
    %282 = vmatpush1.msra.mxu0 0.0
    %283 = vmatprep.subr.mxu0 0.0
    %284 = vmatpush1.msra.mxu0 0.0
    %285 = vmatprep.subr.mxu0 0.0
    %286 = vmatpush1.msra.mxu0 0.0
    %287 = vmatprep.subr.mxu0 0.0
    %288 = vmatpush1.msra.mxu0 0.0
    %289 = vmatprep.mubr.f32.mxu0 0.0
    %290 = vmatmul.mubr.f32.gmra.mrb[0].mxu0 %v223
    %v291 = vpop.f32.mrb[0].mxu0
    %v292 = vadd.f32 %v220, %v291
    %v293 = vpop.f32.mrb[0].mxu0
    %294 = vdwg.mxu0
    %v295 = vadd.f32 %v292, %v122
    %v296 = vmax.f32 %v295, 0.0
    %s297 = scalar_lea.vmem [#allocation2], 96
    %v298 = vld [vmem:[%s297] sm:$0xff]
    %v299 = vld [vmem:[%s297 + $0x8] sm:$0xff]
    %v300 = vld [vmem:[%s297 + $0x10] sm:$0xff]
    %v301 = vld [vmem:[%s297 + $0x18] sm:$0xff]
    %v303 = vlaneseq
    %v304 = vshrl.u32 %v303, 7
    %v305 = vsub.s32 0, %v304
    %v306 = vrot.slane %v39, %v305
    %v309 = vsel %vm136, %v296, 0
    %311 = vmatprep.subr.mxu0 0.0
    %312 = vmatpush1.msra.mxu0 %v298
    %313 = vmatprep.subr.mxu0 0.0
    %314 = vmatpush1.msra.mxu0 %v299
    %315 = vmatprep.subr.mxu0 0.0
    %316 = vmatpush1.msra.mxu0 %v300
    %317 = vmatprep.subr.mxu0 0.0
    %318 = vmatpush1.msra.mxu0 %v301
    %319 = vmatprep.subr.mxu0 0.0
    %320 = vmatpush1.msra.mxu0 0.0
    %321 = vmatprep.subr.mxu0 0.0
    %322 = vmatpush1.msra.mxu0 0.0
    %323 = vmatprep.subr.mxu0 0.0
    %324 = vmatpush1.msra.mxu0 0.0
    %325 = vmatprep.subr.mxu0 0.0
    %326 = vmatpush1.msra.mxu0 0.0
    %327 = vmatprep.subr.mxu0 0.0
    %328 = vmatpush1.msra.mxu0 0.0
    %329 = vmatprep.subr.mxu0 0.0
    %330 = vmatpush1.msra.mxu0 0.0
    %331 = vmatprep.subr.mxu0 0.0
    %332 = vmatpush1.msra.mxu0 0.0
    %333 = vmatprep.subr.mxu0 0.0
    %334 = vmatpush1.msra.mxu0 0.0
    %335 = vmatprep.subr.mxu0 0.0
    %336 = vmatpush1.msra.mxu0 0.0
    %337 = vmatprep.subr.mxu0 0.0
    %338 = vmatpush1.msra.mxu0 0.0
    %339 = vmatprep.subr.mxu0 0.0
    %340 = vmatpush1.msra.mxu0 0.0
    %341 = vmatprep.subr.mxu0 0.0
    %342 = vmatpush1.msra.mxu0 0.0
    %343 = vmatprep.subr.mxu0 0.0
    %344 = vmatpush1.msra.mxu0 0.0
    %345 = vmatprep.subr.mxu0 0.0
    %346 = vmatpush1.msra.mxu0 0.0
    %347 = vmatprep.subr.mxu0 0.0
    %348 = vmatpush1.msra.mxu0 0.0
    %349 = vmatprep.subr.mxu0 0.0
    %350 = vmatpush1.msra.mxu0 0.0
    %351 = vmatprep.subr.mxu0 0.0
    %352 = vmatpush1.msra.mxu0 0.0
    %353 = vmatprep.subr.mxu0 0.0
    %354 = vmatpush1.msra.mxu0 0.0
    %355 = vmatprep.subr.mxu0 0.0
    %356 = vmatpush1.msra.mxu0 0.0
    %357 = vmatprep.subr.mxu0 0.0
    %358 = vmatpush1.msra.mxu0 0.0
    %359 = vmatprep.subr.mxu0 0.0
    %360 = vmatpush1.msra.mxu0 0.0
    %361 = vmatprep.subr.mxu0 0.0
    %362 = vmatpush1.msra.mxu0 0.0
    %363 = vmatprep.subr.mxu0 0.0
    %364 = vmatpush1.msra.mxu0 0.0
    %365 = vmatprep.subr.mxu0 0.0
    %366 = vmatpush1.msra.mxu0 0.0
    %367 = vmatprep.subr.mxu0 0.0
    %368 = vmatpush1.msra.mxu0 0.0
    %369 = vmatprep.subr.mxu0 0.0
    %370 = vmatpush1.msra.mxu0 0.0
    %371 = vmatprep.subr.mxu0 0.0
    %372 = vmatpush1.msra.mxu0 0.0
    %373 = vmatprep.subr.mxu0 0.0
    %374 = vmatpush1.msra.mxu0 0.0
    %375 = vmatprep.mubr.f32.mxu0 0.0
    %376 = vmatmul.mubr.f32.gmra.mrb[0].mxu0 %v309
    %v377 = vpop.f32.mrb[0].mxu0
    %v378 = vadd.f32 %v306, %v377
    %v379 = vpop.f32.mrb[0].mxu0
    %380 = vdwg.mxu0
    %v381 = vmax.f32 %v378, 0.0
    %s382 = scalar_lea.vmem [#allocation2], 128
    %v383 = vld [vmem:[%s382] sm:$0xff]
    %v384 = vld [vmem:[%s382 + $0x8] sm:$0xff]
    %v385 = vld [vmem:[%s382 + $0x10] sm:$0xff]
    %v386 = vld [vmem:[%s382 + $0x18] sm:$0xff]
    %v388 = vlaneseq
    %v389 = vshrl.u32 %v388, 7
    %v390 = vsub.s32 0, %v389
    %v391 = vrot.slane %v40, %v390
    %v394 = vsel %vm136, %v381, 0
    %396 = vmatprep.subr.mxu0 0.0
    %397 = vmatpush1.msra.mxu0 %v383
    %398 = vmatprep.subr.mxu0 0.0
    %399 = vmatpush1.msra.mxu0 %v384
    %400 = vmatprep.subr.mxu0 0.0
    %401 = vmatpush1.msra.mxu0 %v385
    %402 = vmatprep.subr.mxu0 0.0
    %403 = vmatpush1.msra.mxu0 %v386
    %404 = vmatprep.subr.mxu0 0.0
    %405 = vmatpush1.msra.mxu0 0.0
    %406 = vmatprep.subr.mxu0 0.0
    %407 = vmatpush1.msra.mxu0 0.0
    %408 = vmatprep.subr.mxu0 0.0
    %409 = vmatpush1.msra.mxu0 0.0
    %410 = vmatprep.subr.mxu0 0.0
    %411 = vmatpush1.msra.mxu0 0.0
    %412 = vmatprep.subr.mxu0 0.0
    %413 = vmatpush1.msra.mxu0 0.0
    %414 = vmatprep.subr.mxu0 0.0
    %415 = vmatpush1.msra.mxu0 0.0
    %416 = vmatprep.subr.mxu0 0.0
    %417 = vmatpush1.msra.mxu0 0.0
    %418 = vmatprep.subr.mxu0 0.0
    %419 = vmatpush1.msra.mxu0 0.0
    %420 = vmatprep.subr.mxu0 0.0
    %421 = vmatpush1.msra.mxu0 0.0
    %422 = vmatprep.subr.mxu0 0.0
    %423 = vmatpush1.msra.mxu0 0.0
    %424 = vmatprep.subr.mxu0 0.0
    %425 = vmatpush1.msra.mxu0 0.0
    %426 = vmatprep.subr.mxu0 0.0
    %427 = vmatpush1.msra.mxu0 0.0
    %428 = vmatprep.subr.mxu0 0.0
    %429 = vmatpush1.msra.mxu0 0.0
    %430 = vmatprep.subr.mxu0 0.0
    %431 = vmatpush1.msra.mxu0 0.0
    %432 = vmatprep.subr.mxu0 0.0
    %433 = vmatpush1.msra.mxu0 0.0
    %434 = vmatprep.subr.mxu0 0.0
    %435 = vmatpush1.msra.mxu0 0.0
    %436 = vmatprep.subr.mxu0 0.0
    %437 = vmatpush1.msra.mxu0 0.0
    %438 = vmatprep.subr.mxu0 0.0
    %439 = vmatpush1.msra.mxu0 0.0
    %440 = vmatprep.subr.mxu0 0.0
    %441 = vmatpush1.msra.mxu0 0.0
    %442 = vmatprep.subr.mxu0 0.0
    %443 = vmatpush1.msra.mxu0 0.0
    %444 = vmatprep.subr.mxu0 0.0
    %445 = vmatpush1.msra.mxu0 0.0
    %446 = vmatprep.subr.mxu0 0.0
    %447 = vmatpush1.msra.mxu0 0.0
    %448 = vmatprep.subr.mxu0 0.0
    %449 = vmatpush1.msra.mxu0 0.0
    %450 = vmatprep.subr.mxu0 0.0
    %451 = vmatpush1.msra.mxu0 0.0
    %452 = vmatprep.subr.mxu0 0.0
    %453 = vmatpush1.msra.mxu0 0.0
    %454 = vmatprep.subr.mxu0 0.0
    %455 = vmatpush1.msra.mxu0 0.0
    %456 = vmatprep.subr.mxu0 0.0
    %457 = vmatpush1.msra.mxu0 0.0
    %458 = vmatprep.subr.mxu0 0.0
    %459 = vmatpush1.msra.mxu0 0.0
    %460 = vmatprep.mubr.f32.mxu0 0.0
    %461 = vmatmul.mubr.f32.gmra.mrb[0].mxu0 %v394
    %v462 = vpop.f32.mrb[0].mxu0
    %v463 = vadd.f32 %v391, %v462
    %v464 = vpop.f32.mrb[0].mxu0
    %465 = vdwg.mxu0
    %v466 = vadd.f32 %v463, %v296
    %v467 = vmax.f32 %v466, 0.0
    %s468 = scalar_lea.vmem [#allocation2], 160
    %v469 = vld [vmem:[%s468] sm:$0xff]
    %v470 = vld [vmem:[%s468 + $0x8] sm:$0xff]
    %v471 = vld [vmem:[%s468 + $0x10] sm:$0xff]
    %v472 = vld [vmem:[%s468 + $0x18] sm:$0xff]
    %v474 = vlaneseq
    %v475 = vshrl.u32 %v474, 7
    %v476 = vsub.s32 0, %v475
    %v477 = vrot.slane %v41, %v476
    %v480 = vsel %vm136, %v467, 0
    %482 = vmatprep.subr.mxu0 0.0
    %483 = vmatpush1.msra.mxu0 %v469
    %484 = vmatprep.subr.mxu0 0.0
    %485 = vmatpush1.msra.mxu0 %v470
    %486 = vmatprep.subr.mxu0 0.0
    %487 = vmatpush1.msra.mxu0 %v471
    %488 = vmatprep.subr.mxu0 0.0
    %489 = vmatpush1.msra.mxu0 %v472
    %490 = vmatprep.subr.mxu0 0.0
    %491 = vmatpush1.msra.mxu0 0.0
    %492 = vmatprep.subr.mxu0 0.0
    %493 = vmatpush1.msra.mxu0 0.0
    %494 = vmatprep.subr.mxu0 0.0
    %495 = vmatpush1.msra.mxu0 0.0
    %496 = vmatprep.subr.mxu0 0.0
    %497 = vmatpush1.msra.mxu0 0.0
    %498 = vmatprep.subr.mxu0 0.0
    %499 = vmatpush1.msra.mxu0 0.0
    %500 = vmatprep.subr.mxu0 0.0
    %501 = vmatpush1.msra.mxu0 0.0
    %502 = vmatprep.subr.mxu0 0.0
    %503 = vmatpush1.msra.mxu0 0.0
    %504 = vmatprep.subr.mxu0 0.0
    %505 = vmatpush1.msra.mxu0 0.0
    %506 = vmatprep.subr.mxu0 0.0
    %507 = vmatpush1.msra.mxu0 0.0
    %508 = vmatprep.subr.mxu0 0.0
    %509 = vmatpush1.msra.mxu0 0.0
    %510 = vmatprep.subr.mxu0 0.0
    %511 = vmatpush1.msra.mxu0 0.0
    %512 = vmatprep.subr.mxu0 0.0
    %513 = vmatpush1.msra.mxu0 0.0
    %514 = vmatprep.subr.mxu0 0.0
    %515 = vmatpush1.msra.mxu0 0.0
    %516 = vmatprep.subr.mxu0 0.0
    %517 = vmatpush1.msra.mxu0 0.0
    %518 = vmatprep.subr.mxu0 0.0
    %519 = vmatpush1.msra.mxu0 0.0
    %520 = vmatprep.subr.mxu0 0.0
    %521 = vmatpush1.msra.mxu0 0.0
    %522 = vmatprep.subr.mxu0 0.0
    %523 = vmatpush1.msra.mxu0 0.0
    %524 = vmatprep.subr.mxu0 0.0
    %525 = vmatpush1.msra.mxu0 0.0
    %526 = vmatprep.subr.mxu0 0.0
    %527 = vmatpush1.msra.mxu0 0.0
    %528 = vmatprep.subr.mxu0 0.0
    %529 = vmatpush1.msra.mxu0 0.0
    %530 = vmatprep.subr.mxu0 0.0
    %531 = vmatpush1.msra.mxu0 0.0
    %532 = vmatprep.subr.mxu0 0.0
    %533 = vmatpush1.msra.mxu0 0.0
    %534 = vmatprep.subr.mxu0 0.0
    %535 = vmatpush1.msra.mxu0 0.0
    %536 = vmatprep.subr.mxu0 0.0
    %537 = vmatpush1.msra.mxu0 0.0
    %538 = vmatprep.subr.mxu0 0.0
    %539 = vmatpush1.msra.mxu0 0.0
    %540 = vmatprep.subr.mxu0 0.0
    %541 = vmatpush1.msra.mxu0 0.0
    %542 = vmatprep.subr.mxu0 0.0
    %543 = vmatpush1.msra.mxu0 0.0
    %544 = vmatprep.subr.mxu0 0.0
    %545 = vmatpush1.msra.mxu0 0.0
    %546 = vmatprep.mubr.f32.mxu0 0.0
    %547 = vmatmul.mubr.f32.gmra.mrb[0].mxu0 %v480
    %v548 = vpop.f32.mrb[0].mxu0
    %v549 = vadd.f32 %v477, %v548
    %v550 = vpop.f32.mrb[0].mxu0
    %551 = vdwg.mxu0
    %v552 = vmax.f32 %v549, 0.0
    %s553 = scalar_lea.vmem [#allocation2], 192
    %v554 = vld [vmem:[%s553] sm:$0xff]
    %v555 = vld [vmem:[%s553 + $0x8] sm:$0xff]
    %v556 = vld [vmem:[%s553 + $0x10] sm:$0xff]
    %v557 = vld [vmem:[%s553 + $0x18] sm:$0xff]
    %v559 = vlaneseq
    %v560 = vshrl.u32 %v559, 7
    %v561 = vsub.s32 0, %v560
    %v562 = vrot.slane %v42, %v561
    %v565 = vsel %vm136, %v552, 0
    %567 = vmatprep.subr.mxu0 0.0
    %568 = vmatpush1.msra.mxu0 %v554
    %569 = vmatprep.subr.mxu0 0.0
    %570 = vmatpush1.msra.mxu0 %v555
    %571 = vmatprep.subr.mxu0 0.0
    %572 = vmatpush1.msra.mxu0 %v556
    %573 = vmatprep.subr.mxu0 0.0
    %574 = vmatpush1.msra.mxu0 %v557
    %575 = vmatprep.subr.mxu0 0.0
    %576 = vmatpush1.msra.mxu0 0.0
    %577 = vmatprep.subr.mxu0 0.0
    %578 = vmatpush1.msra.mxu0 0.0
    %579 = vmatprep.subr.mxu0 0.0
    %580 = vmatpush1.msra.mxu0 0.0
    %581 = vmatprep.subr.mxu0 0.0
    %582 = vmatpush1.msra.mxu0 0.0
    %583 = vmatprep.subr.mxu0 0.0
    %584 = vmatpush1.msra.mxu0 0.0
    %585 = vmatprep.subr.mxu0 0.0
    %586 = vmatpush1.msra.mxu0 0.0
    %587 = vmatprep.subr.mxu0 0.0
    %588 = vmatpush1.msra.mxu0 0.0
    %589 = vmatprep.subr.mxu0 0.0
    %590 = vmatpush1.msra.mxu0 0.0
    %591 = vmatprep.subr.mxu0 0.0
    %592 = vmatpush1.msra.mxu0 0.0
    %593 = vmatprep.subr.mxu0 0.0
    %594 = vmatpush1.msra.mxu0 0.0
    %595 = vmatprep.subr.mxu0 0.0
    %596 = vmatpush1.msra.mxu0 0.0
    %597 = vmatprep.subr.mxu0 0.0
    %598 = vmatpush1.msra.mxu0 0.0
    %599 = vmatprep.subr.mxu0 0.0
    %600 = vmatpush1.msra.mxu0 0.0
    %601 = vmatprep.subr.mxu0 0.0
    %602 = vmatpush1.msra.mxu0 0.0
    %603 = vmatprep.subr.mxu0 0.0
    %604 = vmatpush1.msra.mxu0 0.0
    %605 = vmatprep.subr.mxu0 0.0
    %606 = vmatpush1.msra.mxu0 0.0
    %607 = vmatprep.subr.mxu0 0.0
    %608 = vmatpush1.msra.mxu0 0.0
    %609 = vmatprep.subr.mxu0 0.0
    %610 = vmatpush1.msra.mxu0 0.0
    %611 = vmatprep.subr.mxu0 0.0
    %612 = vmatpush1.msra.mxu0 0.0
    %613 = vmatprep.subr.mxu0 0.0
    %614 = vmatpush1.msra.mxu0 0.0
    %615 = vmatprep.subr.mxu0 0.0
    %616 = vmatpush1.msra.mxu0 0.0
    %617 = vmatprep.subr.mxu0 0.0
    %618 = vmatpush1.msra.mxu0 0.0
    %619 = vmatprep.subr.mxu0 0.0
    %620 = vmatpush1.msra.mxu0 0.0
    %621 = vmatprep.subr.mxu0 0.0
    %622 = vmatpush1.msra.mxu0 0.0
    %623 = vmatprep.subr.mxu0 0.0
    %624 = vmatpush1.msra.mxu0 0.0
    %625 = vmatprep.subr.mxu0 0.0
    %626 = vmatpush1.msra.mxu0 0.0
    %627 = vmatprep.subr.mxu0 0.0
    %628 = vmatpush1.msra.mxu0 0.0
    %629 = vmatprep.subr.mxu0 0.0
    %630 = vmatpush1.msra.mxu0 0.0
    %631 = vmatprep.mubr.f32.mxu0 0.0
    %632 = vmatmul.mubr.f32.gmra.mrb[0].mxu0 %v565
    %v633 = vpop.f32.mrb[0].mxu0
    %v634 = vadd.f32 %v562, %v633
    %v635 = vpop.f32.mrb[0].mxu0
    %636 = vdwg.mxu0
    %v637 = vadd.f32 %v634, %v467
    %v638 = vmax.f32 %v637, 0.0
    %s639 = scalar_lea.vmem [#allocation2], 224
    %v640 = vld [vmem:[%s639] sm:$0xff]
    %v641 = vld [vmem:[%s639 + $0x8] sm:$0xff]
    %v642 = vld [vmem:[%s639 + $0x10] sm:$0xff]
    %v643 = vld [vmem:[%s639 + $0x18] sm:$0xff]
    %v645 = vlaneseq
    %v646 = vshrl.u32 %v645, 7
    %v647 = vsub.s32 0, %v646
    %v648 = vrot.slane %v43, %v647
    %v651 = vsel %vm136, %v638, 0
    %653 = vmatprep.subr.mxu0 0.0
    %654 = vmatpush1.msra.mxu0 %v640
    %655 = vmatprep.subr.mxu0 0.0
    %656 = vmatpush1.msra.mxu0 %v641
    %657 = vmatprep.subr.mxu0 0.0
    %658 = vmatpush1.msra.mxu0 %v642
    %659 = vmatprep.subr.mxu0 0.0
    %660 = vmatpush1.msra.mxu0 %v643
    %661 = vmatprep.subr.mxu0 0.0
    %662 = vmatpush1.msra.mxu0 0.0
    %663 = vmatprep.subr.mxu0 0.0
    %664 = vmatpush1.msra.mxu0 0.0
    %665 = vmatprep.subr.mxu0 0.0
    %666 = vmatpush1.msra.mxu0 0.0
    %667 = vmatprep.subr.mxu0 0.0
    %668 = vmatpush1.msra.mxu0 0.0
    %669 = vmatprep.subr.mxu0 0.0
    %670 = vmatpush1.msra.mxu0 0.0
    %671 = vmatprep.subr.mxu0 0.0
    %672 = vmatpush1.msra.mxu0 0.0
    %673 = vmatprep.subr.mxu0 0.0
    %674 = vmatpush1.msra.mxu0 0.0
    %675 = vmatprep.subr.mxu0 0.0
    %676 = vmatpush1.msra.mxu0 0.0
    %677 = vmatprep.subr.mxu0 0.0
    %678 = vmatpush1.msra.mxu0 0.0
    %679 = vmatprep.subr.mxu0 0.0
    %680 = vmatpush1.msra.mxu0 0.0
    %681 = vmatprep.subr.mxu0 0.0
    %682 = vmatpush1.msra.mxu0 0.0
    %683 = vmatprep.subr.mxu0 0.0
    %684 = vmatpush1.msra.mxu0 0.0
    %685 = vmatprep.subr.mxu0 0.0
    %686 = vmatpush1.msra.mxu0 0.0
    %687 = vmatprep.subr.mxu0 0.0
    %688 = vmatpush1.msra.mxu0 0.0
    %689 = vmatprep.subr.mxu0 0.0
    %690 = vmatpush1.msra.mxu0 0.0
    %691 = vmatprep.subr.mxu0 0.0
    %692 = vmatpush1.msra.mxu0 0.0
    %693 = vmatprep.subr.mxu0 0.0
    %694 = vmatpush1.msra.mxu0 0.0
    %695 = vmatprep.subr.mxu0 0.0
    %696 = vmatpush1.msra.mxu0 0.0
    %697 = vmatprep.subr.mxu0 0.0
    %698 = vmatpush1.msra.mxu0 0.0
    %699 = vmatprep.subr.mxu0 0.0
    %700 = vmatpush1.msra.mxu0 0.0
    %701 = vmatprep.subr.mxu0 0.0
    %702 = vmatpush1.msra.mxu0 0.0
    %703 = vmatprep.subr.mxu0 0.0
    %704 = vmatpush1.msra.mxu0 0.0
    %705 = vmatprep.subr.mxu0 0.0
    %706 = vmatpush1.msra.mxu0 0.0
    %707 = vmatprep.subr.mxu0 0.0
    %708 = vmatpush1.msra.mxu0 0.0
    %709 = vmatprep.subr.mxu0 0.0
    %710 = vmatpush1.msra.mxu0 0.0
    %711 = vmatprep.subr.mxu0 0.0
    %712 = vmatpush1.msra.mxu0 0.0
    %713 = vmatprep.subr.mxu0 0.0
    %714 = vmatpush1.msra.mxu0 0.0
    %715 = vmatprep.subr.mxu0 0.0
    %716 = vmatpush1.msra.mxu0 0.0
    %717 = vmatprep.mubr.f32.mxu0 0.0
    %718 = vmatmul.mubr.f32.gmra.mrb[0].mxu0 %v651
    %v719 = vpop.f32.mrb[0].mxu0
    %v720 = vadd.f32 %v648, %v719
    %v721 = vpop.f32.mrb[0].mxu0
    %722 = vdwg.mxu0
    %724 = vrot.lane.b32.xlu0 %v720, 8
    %v725 = vpop.permute.xlu0 %724
    %v727 = vsel %vm51, %v34, %v725
    %729 = vrot.lane.b32.xlu0 %v35, 24
    %v730 = vpop.permute.xlu0 %729
    %vm732 = vcmask 195584
    %v733 = vsel %vm732, %v727, %v730
    %v734 = vld [vmem:[%s4] sm:$0xff]
    %v735 = vld [vmem:[%s4 + $0x8] sm:$0xff]
    %v736 = vld [vmem:[%s4 + $0x10] sm:$0xff]
    %v737 = vld [vmem:[%s4 + $0x18] sm:$0xf]
    %vm738 = vcmask 228352
    %v740 = vsel %vm738, %v733, 0
    %vm742 = vcmask 1043456
    %v744 = vsel %vm742, %v737, 0
    %746 = vmatprep.subr.mxu0 0.0
    %747 = vmatpush1.msra.mxu0 %v734
    %748 = vmatprep.subr.mxu0 0.0
    %749 = vmatpush1.msra.mxu0 %v735
    %750 = vmatprep.subr.mxu0 0.0
    %751 = vmatpush1.msra.mxu0 %v736
    %752 = vmatprep.subr.mxu0 0.0
    %753 = vmatpush1.msra.mxu0 %v744
    %754 = vmatprep.subr.mxu0 0.0
    %755 = vmatpush1.msra.mxu0 0.0
    %756 = vmatprep.subr.mxu0 0.0
    %757 = vmatpush1.msra.mxu0 0.0
    %758 = vmatprep.subr.mxu0 0.0
    %759 = vmatpush1.msra.mxu0 0.0
    %760 = vmatprep.subr.mxu0 0.0
    %761 = vmatpush1.msra.mxu0 0.0
    %762 = vmatprep.subr.mxu0 0.0
    %763 = vmatpush1.msra.mxu0 0.0
    %764 = vmatprep.subr.mxu0 0.0
    %765 = vmatpush1.msra.mxu0 0.0
    %766 = vmatprep.subr.mxu0 0.0
    %767 = vmatpush1.msra.mxu0 0.0
    %768 = vmatprep.subr.mxu0 0.0
    %769 = vmatpush1.msra.mxu0 0.0
    %770 = vmatprep.subr.mxu0 0.0
    %771 = vmatpush1.msra.mxu0 0.0
    %772 = vmatprep.subr.mxu0 0.0
    %773 = vmatpush1.msra.mxu0 0.0
    %774 = vmatprep.subr.mxu0 0.0
    %775 = vmatpush1.msra.mxu0 0.0
    %776 = vmatprep.subr.mxu0 0.0
    %777 = vmatpush1.msra.mxu0 0.0
    %778 = vmatprep.subr.mxu0 0.0
    %779 = vmatpush1.msra.mxu0 0.0
    %780 = vmatprep.subr.mxu0 0.0
    %781 = vmatpush1.msra.mxu0 0.0
    %782 = vmatprep.subr.mxu0 0.0
    %783 = vmatpush1.msra.mxu0 0.0
    %784 = vmatprep.subr.mxu0 0.0
    %785 = vmatpush1.msra.mxu0 0.0
    %786 = vmatprep.subr.mxu0 0.0
    %787 = vmatpush1.msra.mxu0 0.0
    %788 = vmatprep.subr.mxu0 0.0
    %789 = vmatpush1.msra.mxu0 0.0
    %790 = vmatprep.subr.mxu0 0.0
    %791 = vmatpush1.msra.mxu0 0.0
    %792 = vmatprep.subr.mxu0 0.0
    %793 = vmatpush1.msra.mxu0 0.0
    %794 = vmatprep.subr.mxu0 0.0
    %795 = vmatpush1.msra.mxu0 0.0
    %796 = vmatprep.subr.mxu0 0.0
    %797 = vmatpush1.msra.mxu0 0.0
    %798 = vmatprep.subr.mxu0 0.0
    %799 = vmatpush1.msra.mxu0 0.0
    %800 = vmatprep.subr.mxu0 0.0
    %801 = vmatpush1.msra.mxu0 0.0
    %802 = vmatprep.subr.mxu0 0.0
    %803 = vmatpush1.msra.mxu0 0.0
    %804 = vmatprep.subr.mxu0 0.0
    %805 = vmatpush1.msra.mxu0 0.0
    %806 = vmatprep.subr.mxu0 0.0
    %807 = vmatpush1.msra.mxu0 0.0
    %808 = vmatprep.subr.mxu0 0.0
    %809 = vmatpush1.msra.mxu0 0.0
    %810 = vmatprep.mubr.f32.mxu0 0.0
    %811 = vmatmul.mubr.f32.gmra.mrb[0].mxu0 %v740
    %v812 = vpop.f32.mrb[0].mxu0
    %v813 = vadd.f32 0.0, %v812
    %v814 = vpop.f32.mrb[0].mxu0
    %815 = vdwg.mxu0
    %816 = vst.msk [vmem:[%s5] sm:$0xff] %vm732, %v727
    %s817 = scalar_lea.vmem %s5, 8
    %818 = vst.msk [vmem:[%s817] sm:$0xff] %vm732, %v813
    // Predicated region
    $region26: #{encode_and_forward.1} parent=1 // pred_check
      _
    $region27: #{encode_and_forward.1} parent=1 // pred_check_branch
      %820 = sbr.rel (0) target = $region29
    $region28: #{encode_and_forward.1} parent=1 // pred_region
      _
    $region29: #{encode_and_forward.1} parent=1 // pred_fallthru
      _
    // Predicated region
    $region30: #{encode_and_forward.1} parent=1 // pred_check
      _
    $region31: #{encode_and_forward.1} parent=1 // pred_check_branch
      %822 = sbr.rel (0) target = $region33
    $region32: #{encode_and_forward.1} parent=1 // pred_region
      _
    $region33: #{encode_and_forward.1} parent=1 // pred_fallthru
      _
    %823 = vsyncpa [#allocation3], 1

</llo_original>
